<compile_context>
chip_gen: v5e
topology: v5e:2x2
jax: 0.10.0
libtpu: 0.0.40
codegen_flags: <defaults>
</compile_context>

<pallas_src>
import jax
import jax.numpy as jnp
from jax.experimental import pallas as pl
from jax.experimental.pallas import tpu as pltpu

# Layer widths of the control_net MLP: 6 -> 16 -> 32 -> 64 -> 32 -> 16 -> 2
LAYER_DIMS = [6, 16, 32, 64, 32, 16, 2]
NUM_LAYERS = len(LAYER_DIMS) - 1
IN_DIM = LAYER_DIMS[0]
OUT_DIM = LAYER_DIMS[-1]
PAD = 128  # lane width: every hidden layer is zero-padded to 128 features


def navnet_kernel(x_ref, w_ref, b_ref, o_ref, xpad_ref):
    """x_ref:    (TB, 6)              f32 input tile (un-padded, 24 B/row HBM traffic).
    w_ref:    (NUM_LAYERS, 128, 128)  bf16 zero-padded weights (in, out), resident.
    b_ref:    (NUM_LAYERS, 1, 128)    f32 zero-padded biases, resident.
    o_ref:    (TB, 2)                 output tile (real width, 8 B/row writeback).
    xpad_ref: (TB, 128)               f32 VMEM scratch = lane-padded layer-0 input."""
    tb = x_ref.shape[0]

    # Zero-extend the input to 128 lanes inside the kernel. Padded weight rows are
    # zero so the padded lanes contribute exactly 0; zeroing every step keeps the
    # scratch well-defined regardless of how the grid is split across TensorCores.
    xpad_ref[...] = jnp.zeros_like(xpad_ref)
    xpad_ref[:, :IN_DIM] = x_ref[...].astype(jnp.float32)

    # Split the tile into independent row chunks (statically unrolled -> one basic
    # block) so chunk j's MXU matmul can overlap chunk j-1's EUP tanh.
    if tb >= 32 and tb % 32 == 0:
        n_chunks = 4
    elif tb >= 16 and tb % 16 == 0:
        n_chunks = 2
    else:
        n_chunks = 1
    rows = tb // n_chunks  # multiple of 8 by construction

    for c in range(n_chunks):
        h = xpad_ref[c * rows:(c + 1) * rows, :]                  # (rows, 128) f32
        for i in range(NUM_LAYERS):                               # statically unrolled
            # bf16 operands on the MXU, f32 accumulation; bias add + tanh stay f32
            # (v5e has no bf16 VPU/EUP).
            z = jnp.dot(h.astype(jnp.bfloat16), w_ref[i],
                        preferred_element_type=jnp.float32) + b_ref[i]
            h = jnp.tanh(z)
        o_ref[c * rows:(c + 1) * rows, :] = h[:, :OUT_DIM].astype(o_ref.dtype)


def init_params(key):
    """PyTorch nn.Linear default init: U(-1/sqrt(fan_in), 1/sqrt(fan_in)).
    Weights are stored pre-transposed as (in, out), biases as (1, out)."""
    params = []
    for i in range(NUM_LAYERS):
        fan_in, fan_out = LAYER_DIMS[i], LAYER_DIMS[i + 1]
        key, kw, kb = jax.random.split(key, 3)
        bound = 1.0 / (fan_in ** 0.5)
        w = jax.random.uniform(kw, (fan_in, fan_out), jnp.float32, -bound, bound)
        b = jax.random.uniform(kb, (1, fan_out), jnp.float32, -bound, bound)
        params.append((w, b))
    return params


def pack_params(params):
    """Pack per-layer (w, b) into zero-padded 128-wide slabs (once, at trace time).
    Weights -> bf16 (MXU operands, half the resident slab); biases stay f32."""
    w_slab = jnp.zeros((NUM_LAYERS, PAD, PAD), jnp.bfloat16)
    b_slab = jnp.zeros((NUM_LAYERS, 1, PAD), jnp.float32)
    for i, (w, b) in enumerate(params):
        w_slab = w_slab.at[i, : w.shape[0], : w.shape[1]].set(w.astype(jnp.bfloat16))
        b_slab = b_slab.at[i, :, : b.shape[1]].set(b)
    return w_slab, b_slab


def navigation_net(current_state, w_slab, b_slab, *, tb_max=4096):
    """Pallas forward pass: current_state (B, 6) -> (B, 2)."""
    B, in_dim = current_state.shape
    assert in_dim == IN_DIM, in_dim
    x = current_state.astype(jnp.float32)  # no wrapper-side lane padding

    # Batch tile: multiple of 8 sublanes, capped by tb_max, and also capped at
    # ceil(B/2) rounded to 8 so the "parallel" grid has >=2 steps when B allows it
    # (lets v7x's two TensorCores split the work; no-op on single-TC v5e/v6e).
    half = ((pl.cdiv(B, 2) + 7) // 8) * 8
    tb = min(tb_max, max(8, half))
    grid = (pl.cdiv(B, tb),)

    # Honest DMA-traffic estimate: de-padded I/O plus the resident parameter slabs.
    w_bytes = NUM_LAYERS * PAD * PAD * 2          # bf16 weight slab
    b_bytes = NUM_LAYERS * 1 * PAD * 4            # f32 bias slab
    cost = pl.CostEstimate(
        flops=2 * B * sum(LAYER_DIMS[i] * LAYER_DIMS[i + 1] for i in range(NUM_LAYERS)),
        transcendentals=B * sum(LAYER_DIMS[1:]),
        bytes_accessed=B * (IN_DIM + OUT_DIM) * 4 + w_bytes + b_bytes,
    )

    return pl.pallas_call(
        navnet_kernel,
        out_shape=jax.ShapeDtypeStruct((B, OUT_DIM), current_state.dtype),
        grid_spec=pltpu.PrefetchScalarGridSpec(
            num_scalar_prefetch=0,
            grid=grid,
            in_specs=[
                pl.BlockSpec((tb, IN_DIM), lambda i: (i, 0)),                # (tb, 6) input
                pl.BlockSpec((NUM_LAYERS, PAD, PAD), lambda i: (0, 0, 0)),   # weights (resident)
                pl.BlockSpec((NUM_LAYERS, 1, PAD), lambda i: (0, 0, 0)),     # biases (resident)
            ],
            out_specs=pl.BlockSpec((tb, OUT_DIM), lambda i: (i, 0)),         # (tb, 2) output
            scratch_shapes=[pltpu.VMEM((tb, PAD), jnp.float32)],             # padded input
        ),
        compiler_params=pltpu.CompilerParams(
            dimension_semantics=("parallel",),
            vmem_limit_bytes=32 * 1024 * 1024,
        ),
        cost_estimate=cost,
    )(x, w_slab, b_slab)


def navigation_net_ref(current_state, params):
    """Plain-JAX f32 reference of the same forward pass (correctness check)."""
    h = current_state.astype(jnp.float32)
    for w, b in params:
        h = jnp.tanh(jnp.dot(h, w, preferred_element_type=jnp.float32) + b)
    return h


if __name__ == "__main__":
    key = jax.random.PRNGKey(0)
    key, k_in = jax.random.split(key)

    params = init_params(key)
    w_slab, b_slab = pack_params(params)

    # Small single-tile case: batch=8, state dim=6.
    current_state = jax.random.normal(k_in, (8, IN_DIM), dtype=jnp.float32)
    out = jax.block_until_ready(navigation_net(current_state, w_slab, b_slab))
    ref = navigation_net_ref(current_state, params)
    assert out.shape == (8, OUT_DIM), out.shape
    # bf16 MXU operands -> relaxed tolerance vs f32 reference (outputs lie in [-1, 1]).
    assert jnp.allclose(out, ref, atol=2e-2, rtol=2e-2), "mismatch vs reference (B=8)"

    # Multi-tile case with a ragged final block (batch grid + clipping + row chunking).
    key, k_in2 = jax.random.split(key)
    big_state = jax.random.normal(k_in2, (40, IN_DIM), dtype=jnp.float32)
    out_big = jax.block_until_ready(navigation_net(big_state, w_slab, b_slab, tb_max=16))
    ref_big = navigation_net_ref(big_state, params)
    assert out_big.shape == (40, OUT_DIM), out_big.shape
    assert jnp.allclose(out_big, ref_big, atol=2e-2, rtol=2e-2), "mismatch vs reference (B=40)"

    print("KERNEL_OK")
</pallas_src>

<mosaic_0001>
module attributes {stable_mosaic.version = 11 : i64} {
  func.func @navnet_kernel(%arg0: i32, %arg1: memref<8x6xf32, #tpu.memory_space<vmem>>, %arg2: memref<6x128x128xbf16, #tpu.memory_space<vmem>>, %arg3: memref<6x1x128xf32, #tpu.memory_space<vmem>>, %arg4: memref<8x2xf32, #tpu.memory_space<vmem>>, %arg5: memref<8x128xf32, #tpu.memory_space<vmem>>) attributes {dimension_semantics = [#tpu.dimension_semantics<parallel>], iteration_bounds = array<i64: 1>, scalar_prefetch = 0 : i64, scratch_operands = 1 : i64, tpu.core_type = #tpu.core_type<tc>, window_params = [{transform_indices = @transform_0, window_bounds = array<i64: 8, 6>}, {pipeline_mode = #tpu.pipeline_mode<synchronous>, transform_indices = @transform_1, window_bounds = array<i64: 6, 128, 128>}, {pipeline_mode = #tpu.pipeline_mode<synchronous>, transform_indices = @transform_2, window_bounds = array<i64: 6, 1, 128>}, {transform_indices = @transform_3, window_bounds = array<i64: 8, 2>}]} {
    %cst = arith.constant 0.000000e+00 : f32
    %0 = vector.broadcast %cst : f32 to vector<8x128xf32>
    %c0 = arith.constant 0 : index
    %c0_0 = arith.constant 0 : index
    %1 = vector.load %arg5[%c0, %c0_0] : memref<8x128xf32, #tpu.memory_space<vmem>>, vector<8x128xf32>
    tpu.vector_store %arg5[%c0, %c0_0], %0 {strides = array<i32>} : memref<8x128xf32, #tpu.memory_space<vmem>>, vector<8x128xf32>,
    %c0_1 = arith.constant 0 : index
    %c0_2 = arith.constant 0 : index
    %2 = vector.load %arg1[%c0_1, %c0_2] : memref<8x6xf32, #tpu.memory_space<vmem>>, vector<8x6xf32>
    %c0_3 = arith.constant 0 : index
    %c0_4 = arith.constant 0 : index
    %3 = vector.load %arg5[%c0_3, %c0_4] : memref<8x128xf32, #tpu.memory_space<vmem>>, vector<8x6xf32>
    tpu.vector_store %arg5[%c0_3, %c0_4], %2 {strides = array<i32>} : memref<8x128xf32, #tpu.memory_space<vmem>>, vector<8x6xf32>,
    %c0_5 = arith.constant 0 : index
    %c0_6 = arith.constant 0 : index
    %4 = vector.load %arg5[%c0_5, %c0_6] : memref<8x128xf32, #tpu.memory_space<vmem>>, vector<8x128xf32>
    %5 = arith.truncf %4 : vector<8x128xf32> to vector<8x128xbf16>
    %c0_7 = arith.constant 0 : index
    %c0_8 = arith.constant 0 : index
    %c0_9 = arith.constant 0 : index
    %6 = vector.load %arg2[%c0_7, %c0_8, %c0_9] : memref<6x128x128xbf16, #tpu.memory_space<vmem>>, vector<1x128x128xbf16>
    %7 = vector.shape_cast %6 : vector<1x128x128xbf16> to vector<128x128xbf16>
    %cst_10 = arith.constant dense<0.000000e+00> : vector<8x128xf32>
    %8 = tpu.matmul %5, %7, %cst_10 {dimension_numbers = #tpu.dot_dimension_numbers<[1], [0], [0], [1], [0, 0, 1, 1], [], []>} : vector<8x128xbf16>, vector<128x128xbf16>, vector<8x128xf32> -> vector<8x128xf32>
    %c0_11 = arith.constant 0 : index
    %c0_12 = arith.constant 0 : index
    %c0_13 = arith.constant 0 : index
    %9 = vector.load %arg3[%c0_11, %c0_12, %c0_13] : memref<6x1x128xf32, #tpu.memory_space<vmem>>, vector<1x1x128xf32>
    %10 = vector.shape_cast %9 : vector<1x1x128xf32> to vector<1x128xf32>
    %11 = vector.broadcast %10 : vector<1x128xf32> to vector<8x128xf32>
    %12 = arith.addf %8, %11 : vector<8x128xf32>
    %13 = math.tanh %12 : vector<8x128xf32>
    %14 = arith.truncf %13 : vector<8x128xf32> to vector<8x128xbf16>
    %c1 = arith.constant 1 : index
    %c0_14 = arith.constant 0 : index
    %c0_15 = arith.constant 0 : index
    %15 = vector.load %arg2[%c1, %c0_14, %c0_15] : memref<6x128x128xbf16, #tpu.memory_space<vmem>>, vector<1x128x128xbf16>
    %16 = vector.shape_cast %15 : vector<1x128x128xbf16> to vector<128x128xbf16>
    %cst_16 = arith.constant dense<0.000000e+00> : vector<8x128xf32>
    %17 = tpu.matmul %14, %16, %cst_16 {dimension_numbers = #tpu.dot_dimension_numbers<[1], [0], [0], [1], [0, 0, 1, 1], [], []>} : vector<8x128xbf16>, vector<128x128xbf16>, vector<8x128xf32> -> vector<8x128xf32>
    %c1_17 = arith.constant 1 : index
    %c0_18 = arith.constant 0 : index
    %c0_19 = arith.constant 0 : index
    %18 = vector.load %arg3[%c1_17, %c0_18, %c0_19] : memref<6x1x128xf32, #tpu.memory_space<vmem>>, vector<1x1x128xf32>
    %19 = vector.shape_cast %18 : vector<1x1x128xf32> to vector<1x128xf32>
    %20 = vector.broadcast %19 : vector<1x128xf32> to vector<8x128xf32>
    %21 = arith.addf %17, %20 : vector<8x128xf32>
    %22 = math.tanh %21 : vector<8x128xf32>
    %23 = arith.truncf %22 : vector<8x128xf32> to vector<8x128xbf16>
    %c2 = arith.constant 2 : index
    %c0_20 = arith.constant 0 : index
    %c0_21 = arith.constant 0 : index
    %24 = vector.load %arg2[%c2, %c0_20, %c0_21] : memref<6x128x128xbf16, #tpu.memory_space<vmem>>, vector<1x128x128xbf16>
    %25 = vector.shape_cast %24 : vector<1x128x128xbf16> to vector<128x128xbf16>
    %cst_22 = arith.constant dense<0.000000e+00> : vector<8x128xf32>
    %26 = tpu.matmul %23, %25, %cst_22 {dimension_numbers = #tpu.dot_dimension_numbers<[1], [0], [0], [1], [0, 0, 1, 1], [], []>} : vector<8x128xbf16>, vector<128x128xbf16>, vector<8x128xf32> -> vector<8x128xf32>
    %c2_23 = arith.constant 2 : index
    %c0_24 = arith.constant 0 : index
    %c0_25 = arith.constant 0 : index
    %27 = vector.load %arg3[%c2_23, %c0_24, %c0_25] : memref<6x1x128xf32, #tpu.memory_space<vmem>>, vector<1x1x128xf32>
    %28 = vector.shape_cast %27 : vector<1x1x128xf32> to vector<1x128xf32>
    %29 = vector.broadcast %28 : vector<1x128xf32> to vector<8x128xf32>
    %30 = arith.addf %26, %29 : vector<8x128xf32>
    %31 = math.tanh %30 : vector<8x128xf32>
    %32 = arith.truncf %31 : vector<8x128xf32> to vector<8x128xbf16>
    %c3 = arith.constant 3 : index
    %c0_26 = arith.constant 0 : index
    %c0_27 = arith.constant 0 : index
    %33 = vector.load %arg2[%c3, %c0_26, %c0_27] : memref<6x128x128xbf16, #tpu.memory_space<vmem>>, vector<1x128x128xbf16>
    %34 = vector.shape_cast %33 : vector<1x128x128xbf16> to vector<128x128xbf16>
    %cst_28 = arith.constant dense<0.000000e+00> : vector<8x128xf32>
    %35 = tpu.matmul %32, %34, %cst_28 {dimension_numbers = #tpu.dot_dimension_numbers<[1], [0], [0], [1], [0, 0, 1, 1], [], []>} : vector<8x128xbf16>, vector<128x128xbf16>, vector<8x128xf32> -> vector<8x128xf32>
    %c3_29 = arith.constant 3 : index
    %c0_30 = arith.constant 0 : index
    %c0_31 = arith.constant 0 : index
    %36 = vector.load %arg3[%c3_29, %c0_30, %c0_31] : memref<6x1x128xf32, #tpu.memory_space<vmem>>, vector<1x1x128xf32>
    %37 = vector.shape_cast %36 : vector<1x1x128xf32> to vector<1x128xf32>
    %38 = vector.broadcast %37 : vector<1x128xf32> to vector<8x128xf32>
    %39 = arith.addf %35, %38 : vector<8x128xf32>
    %40 = math.tanh %39 : vector<8x128xf32>
    %41 = arith.truncf %40 : vector<8x128xf32> to vector<8x128xbf16>
    %c4 = arith.constant 4 : index
    %c0_32 = arith.constant 0 : index
    %c0_33 = arith.constant 0 : index
    %42 = vector.load %arg2[%c4, %c0_32, %c0_33] : memref<6x128x128xbf16, #tpu.memory_space<vmem>>, vector<1x128x128xbf16>
    %43 = vector.shape_cast %42 : vector<1x128x128xbf16> to vector<128x128xbf16>
    %cst_34 = arith.constant dense<0.000000e+00> : vector<8x128xf32>
    %44 = tpu.matmul %41, %43, %cst_34 {dimension_numbers = #tpu.dot_dimension_numbers<[1], [0], [0], [1], [0, 0, 1, 1], [], []>} : vector<8x128xbf16>, vector<128x128xbf16>, vector<8x128xf32> -> vector<8x128xf32>
    %c4_35 = arith.constant 4 : index
    %c0_36 = arith.constant 0 : index
    %c0_37 = arith.constant 0 : index
    %45 = vector.load %arg3[%c4_35, %c0_36, %c0_37] : memref<6x1x128xf32, #tpu.memory_space<vmem>>, vector<1x1x128xf32>
    %46 = vector.shape_cast %45 : vector<1x1x128xf32> to vector<1x128xf32>
    %47 = vector.broadcast %46 : vector<1x128xf32> to vector<8x128xf32>
    %48 = arith.addf %44, %47 : vector<8x128xf32>
    %49 = math.tanh %48 : vector<8x128xf32>
    %50 = arith.truncf %49 : vector<8x128xf32> to vector<8x128xbf16>
    %c5 = arith.constant 5 : index
    %c0_38 = arith.constant 0 : index
    %c0_39 = arith.constant 0 : index
    %51 = vector.load %arg2[%c5, %c0_38, %c0_39] : memref<6x128x128xbf16, #tpu.memory_space<vmem>>, vector<1x128x128xbf16>
    %52 = vector.shape_cast %51 : vector<1x128x128xbf16> to vector<128x128xbf16>
    %cst_40 = arith.constant dense<0.000000e+00> : vector<8x128xf32>
    %53 = tpu.matmul %50, %52, %cst_40 {dimension_numbers = #tpu.dot_dimension_numbers<[1], [0], [0], [1], [0, 0, 1, 1], [], []>} : vector<8x128xbf16>, vector<128x128xbf16>, vector<8x128xf32> -> vector<8x128xf32>
    %c5_41 = arith.constant 5 : index
    %c0_42 = arith.constant 0 : index
    %c0_43 = arith.constant 0 : index
    %54 = vector.load %arg3[%c5_41, %c0_42, %c0_43] : memref<6x1x128xf32, #tpu.memory_space<vmem>>, vector<1x1x128xf32>
    %55 = vector.shape_cast %54 : vector<1x1x128xf32> to vector<1x128xf32>
    %56 = vector.broadcast %55 : vector<1x128xf32> to vector<8x128xf32>
    %57 = arith.addf %53, %56 : vector<8x128xf32>
    %58 = math.tanh %57 : vector<8x128xf32>
    %59 = vector.extract_strided_slice %58 {offsets = [0, 0], sizes = [8, 2], strides = [1, 1]} : vector<8x128xf32> to vector<8x2xf32>
    %c0_44 = arith.constant 0 : index
    %c0_45 = arith.constant 0 : index
    %60 = vector.load %arg4[%c0_44, %c0_45] : memref<8x2xf32, #tpu.memory_space<vmem>>, vector<8x2xf32>
    tpu.vector_store %arg4[%c0_44, %c0_45], %59 {strides = array<i32>} : memref<8x2xf32, #tpu.memory_space<vmem>>, vector<8x2xf32>,
    return
  }
  func.func @transform_0(%arg0: i32) -> (i32, i32) {
    %c0_i32 = arith.constant 0 : i32
    %c0_i32_0 = arith.constant 0 : i32
    return %arg0, %c0_i32 : i32, i32
  }
  func.func @transform_1(%arg0: i32) -> (i32, i32, i32) {
    %c0_i32 = arith.constant 0 : i32
    %c0_i32_0 = arith.constant 0 : i32
    %c0_i32_1 = arith.constant 0 : i32
    %c0_i32_2 = arith.constant 0 : i32
    return %c0_i32, %c0_i32_0, %c0_i32_1 : i32, i32, i32
  }
  func.func @transform_2(%arg0: i32) -> (i32, i32, i32) {
    %c0_i32 = arith.constant 0 : i32
    %c0_i32_0 = arith.constant 0 : i32
    %c0_i32_1 = arith.constant 0 : i32
    %c0_i32_2 = arith.constant 0 : i32
    return %c0_i32, %c0_i32_0, %c0_i32_1 : i32, i32, i32
  }
  func.func @transform_3(%arg0: i32) -> (i32, i32) {
    %c0_i32 = arith.constant 0 : i32
    %c0_i32_0 = arith.constant 0 : i32
    return %arg0, %c0_i32 : i32, i32
  }
}

</mosaic_0001>

<llo_original>
// kernel: tpu_custom_call.1
$region0: #{tpu_custom_call.1}
  #allocation0 [shape = 'u32[]', space=smem, size = 0x4, offset = 0x4, fixed_abs, tag = 'smem constant byte address 0x4 - core index']
  #allocation1 [shape = 'u32[72,128]{1,0:T(1,128)}', space=vmem, size = 0x9000, scoped, tag = 'internal scratch']
  #allocation2 [shape = 'f32[8,128]{1,0:T(8,128)}', space=vmem, size = 0x1000, scoped, tag = 'scratch operand']
  %s0 = inlined_call_operand.hbm [shape: f32[8,6], index: 0, kind: input, shape index: {}]
  %s1 = inlined_call_operand.hbm [shape: bf16[6,128,128], index: 1, kind: input, shape index: {}]
  %s2 = inlined_call_operand.hbm [shape: f32[6,1,128], index: 2, kind: input, shape index: {}]
  %s3 = inlined_call_operand.vmem [shape: f32[8,2], index: 3, kind: output, shape index: {}]
  %s4 = sld [smem:[#allocation0]]
  $region34: #{tpu_custom_call.1} parent=0
    _
  %s6 = ssub.s32 1, %s4
  %s7 = scalar_select 0, %s6, %s4
  $region1: #{tpu_custom_call.1} parent=0
    #allocation3 [shape = 'u8[4096]{0}', space=vmem, size = 0x1000, scoped, tag = 'input window, operand 0, single buffered']
    #allocation4 [shape = 's32[1]{0}', space=sflag, size = 0x4, scoped, tag = 'scoped memory for tpu_custom_call.1']
    #allocation5 [shape = 'u8[196608]{0}', space=vmem, size = 0x30000, scoped, tag = 'input window, operand 1, single buffered']
    #allocation6 [shape = 's32[1]{0}', space=sflag, size = 0x4, scoped, tag = 'scoped memory for tpu_custom_call.1']
    #allocation7 [shape = 'u8[3072]{0}', space=vmem, size = 0xc00, scoped, tag = 'input window, operand 2, single buffered']
    %8 = vsyncpa [#allocation4], 0
    %9 = vsyncpa [#allocation6], 0
    // Predicated region
    $region2: #{tpu_custom_call.1} parent=1 // pred_check
      _
    $region3: #{tpu_custom_call.1} parent=1 // pred_check_branch
      %11 = sbr.rel (0) target = $region5
    $region4: #{tpu_custom_call.1} parent=1 // pred_region
      %13 = vsyncadd [#allocation4], 0
      %s15 = sshll.u32 %s0, 4
      %s16 = int_to_ptr.hbm [resolvable:$true] %s15
      %s17 = sshll.u32 [#allocation3], 4
      %s18 = int_to_ptr.vmem [resolvable:$true] %s17
      %20 = dma.hbm_to_vmem [thread:$0]  %s16, 128, %s18, [#allocation4]
    $region5: #{tpu_custom_call.1} parent=1 // pred_fallthru
      _
    // Predicated region
    $region6: #{tpu_custom_call.1} parent=1 // pred_check
      _
    $region7: #{tpu_custom_call.1} parent=1 // pred_check_branch
      %22 = sbr.rel (0) target = $region9
    $region8: #{tpu_custom_call.1} parent=1 // pred_region
      %24 = vsyncadd [#allocation6], 0
      %s25 = sshll.u32 %s1, 4
      %s26 = int_to_ptr.hbm [resolvable:$true] %s25
      %s27 = sshll.u32 [#allocation5], 4
      %s28 = int_to_ptr.vmem [resolvable:$true] %s27
      %33 = dma.hbm_to_vmem [thread:$0]  %s26, 6144, %s28, [#allocation6], 64, 64, 4
    $region9: #{tpu_custom_call.1} parent=1 // pred_fallthru
      _
    // Predicated region
    $region10: #{tpu_custom_call.1} parent=1 // pred_check
      _
    $region11: #{tpu_custom_call.1} parent=1 // pred_check_branch
      %35 = sbr.rel (0) target = $region13
    $region12: #{tpu_custom_call.1} parent=1 // pred_region
      %37 = vsyncadd [#allocation6], 0
      %s38 = sshll.u32 %s2, 4
      %s39 = int_to_ptr.hbm [resolvable:$true] %s38
      %s40 = sshll.u32 [#allocation7], 4
      %s41 = int_to_ptr.vmem [resolvable:$true] %s40
      %46 = dma.hbm_to_vmem [thread:$0]  %s39, 96, %s41, [#allocation6], 16, 16, 1
    $region13: #{tpu_custom_call.1} parent=1 // pred_fallthru
      _
    // Predicated region
    $region14: #{tpu_custom_call.1} parent=1 // pred_check
      _
    $region15: #{tpu_custom_call.1} parent=1 // pred_check_branch
      %48 = sbr.rel (0) target = $region17
    $region16: #{tpu_custom_call.1} parent=1 // pred_region
      %50 = dma.done [#allocation4], 128
    $region17: #{tpu_custom_call.1} parent=1 // pred_fallthru
      _
    // Predicated region
    $region18: #{tpu_custom_call.1} parent=1 // pred_check
      _
    $region19: #{tpu_custom_call.1} parent=1 // pred_check_branch
      %52 = sbr.rel (0) target = $region21
    $region20: #{tpu_custom_call.1} parent=1 // pred_region
      %54 = dma.done [#allocation6], 6144
    $region21: #{tpu_custom_call.1} parent=1 // pred_fallthru
      _
    // Predicated region
    $region22: #{tpu_custom_call.1} parent=1 // pred_check
      _
    $region23: #{tpu_custom_call.1} parent=1 // pred_check_branch
      %56 = sbr.rel (0) target = $region25
    $region24: #{tpu_custom_call.1} parent=1 // pred_region
      %58 = dma.done [#allocation6], 96
    $region25: #{tpu_custom_call.1} parent=1 // pred_fallthru
      _
    %59 = vst [vmem:[#allocation2] sm:$0xff] 0.0
    %v60 = vld [vmem:[#allocation3] sm:$0xff]
    %vm61 = vcmask 48128
    %62 = vst.msk [vmem:[#allocation2] sm:$0xff] %vm61, %v60
    %v63 = vld [vmem:[#allocation2] sm:$0xff]
    %v64 = vpack.c.bf16 %v63, %v63
    %v65 = vld [vmem:[#allocation5] sm:$0xf]
    %v66 = vld [vmem:[#allocation5 + $0x4] sm:$0xf]
    %v67 = vld [vmem:[#allocation5 + $0x8] sm:$0xf]
    %v68 = vld [vmem:[#allocation5 + $0xc] sm:$0xf]
    %v69 = vld [vmem:[#allocation5 + $0x10] sm:$0xf]
    %v70 = vld [vmem:[#allocation5 + $0x14] sm:$0xf]
    %v71 = vld [vmem:[#allocation5 + $0x18] sm:$0xf]
    %v72 = vld [vmem:[#allocation5 + $0x1c] sm:$0xf]
    %v73 = vld [vmem:[#allocation5 + $0x20] sm:$0xf]
    %v74 = vld [vmem:[#allocation5 + $0x24] sm:$0xf]
    %v75 = vld [vmem:[#allocation5 + $0x28] sm:$0xf]
    %v76 = vld [vmem:[#allocation5 + $0x2c] sm:$0xf]
    %v77 = vld [vmem:[#allocation5 + $0x30] sm:$0xf]
    %v78 = vld [vmem:[#allocation5 + $0x34] sm:$0xf]
    %v79 = vld [vmem:[#allocation5 + $0x38] sm:$0xf]
    %v80 = vld [vmem:[#allocation5 + $0x3c] sm:$0xf]
    %v81 = vld [vmem:[#allocation7] sm:$0x1]
    %v83 = vperm.slane %v81, 0
    %v101 = vunpack.c.l.b16 %v65
    %v102 = vunpack.c.l.b16 %v66
    %v103 = vunpack.c.l.b16 %v67
    %v104 = vunpack.c.l.b16 %v68
    %v105 = vunpack.c.l.b16 %v69
    %v106 = vunpack.c.l.b16 %v70
    %v107 = vunpack.c.l.b16 %v71
    %v108 = vunpack.c.l.b16 %v72
    %v109 = vunpack.c.l.b16 %v73
    %v110 = vunpack.c.l.b16 %v74
    %v111 = vunpack.c.l.b16 %v75
    %v112 = vunpack.c.l.b16 %v76
    %v113 = vunpack.c.l.b16 %v77
    %v114 = vunpack.c.l.b16 %v78
    %v115 = vunpack.c.l.b16 %v79
    %v116 = vunpack.c.l.b16 %v80
    %v117 = vpack.c.b16 %v102, %v101
    %v118 = vpack.c.b16 %v104, %v103
    %v119 = vpack.c.b16 %v106, %v105
    %v120 = vpack.c.b16 %v108, %v107
    %v121 = vpack.c.b16 %v110, %v109
    %v122 = vpack.c.b16 %v112, %v111
    %v123 = vpack.c.b16 %v114, %v113
    %v124 = vpack.c.b16 %v116, %v115
    %133 = vmatpush.bf16.msra.mxu0 %v124
    %134 = vmatpush.bf16.msra.mxu0 %v123
    %135 = vmatpush.bf16.msra.mxu0 %v122
    %136 = vmatpush.bf16.msra.mxu0 %v121
    %137 = vmatpush.bf16.msra.mxu0 %v120
    %138 = vmatpush.bf16.msra.mxu0 %v119
    %139 = vmatpush.bf16.msra.mxu0 %v118
    %140 = vmatpush.bf16.msra.mxu0 %v117
    %141 = vmatmul.bf16.gmra.mxu0 %v64
    %v142 = vpop.f32.mrf.mxu0
    %v143 = vadd.f32 %v83, %v142
    %v144 = vpop.f32.mrf.mxu0
    %145 = vdwg.mxu0
    %v146 = vtanh.pop %v143
    %v147 = vpack.c.bf16 %v146, %v146
    %s148 = scalar_lea.vmem [#allocation5], 64
    %v149 = vld [vmem:[%s148] sm:$0xf]
    %v150 = vld [vmem:[%s148 + $0x4] sm:$0xf]
    %v151 = vld [vmem:[%s148 + $0x8] sm:$0xf]
    %v152 = vld [vmem:[%s148 + $0xc] sm:$0xf]
    %v153 = vld [vmem:[%s148 + $0x10] sm:$0xf]
    %v154 = vld [vmem:[%s148 + $0x14] sm:$0xf]
    %v155 = vld [vmem:[%s148 + $0x18] sm:$0xf]
    %v156 = vld [vmem:[%s148 + $0x1c] sm:$0xf]
    %v157 = vld [vmem:[%s148 + $0x20] sm:$0xf]
    %v158 = vld [vmem:[%s148 + $0x24] sm:$0xf]
    %v159 = vld [vmem:[%s148 + $0x28] sm:$0xf]
    %v160 = vld [vmem:[%s148 + $0x2c] sm:$0xf]
    %v161 = vld [vmem:[%s148 + $0x30] sm:$0xf]
    %v162 = vld [vmem:[%s148 + $0x34] sm:$0xf]
    %v163 = vld [vmem:[%s148 + $0x38] sm:$0xf]
    %v164 = vld [vmem:[%s148 + $0x3c] sm:$0xf]
    %s165 = scalar_lea.vmem [#allocation7], 1
    %v166 = vld [vmem:[%s165] sm:$0x1]
    %v168 = vperm.slane %v166, 0
    %v186 = vunpack.c.l.b16 %v149
    %v187 = vunpack.c.l.b16 %v150
    %v188 = vunpack.c.l.b16 %v151
    %v189 = vunpack.c.l.b16 %v152
    %v190 = vunpack.c.l.b16 %v153
    %v191 = vunpack.c.l.b16 %v154
    %v192 = vunpack.c.l.b16 %v155
    %v193 = vunpack.c.l.b16 %v156
    %v194 = vunpack.c.l.b16 %v157
    %v195 = vunpack.c.l.b16 %v158
    %v196 = vunpack.c.l.b16 %v159
    %v197 = vunpack.c.l.b16 %v160
    %v198 = vunpack.c.l.b16 %v161
    %v199 = vunpack.c.l.b16 %v162
    %v200 = vunpack.c.l.b16 %v163
    %v201 = vunpack.c.l.b16 %v164
    %v202 = vpack.c.b16 %v187, %v186
    %v203 = vpack.c.b16 %v189, %v188
    %v204 = vpack.c.b16 %v191, %v190
    %v205 = vpack.c.b16 %v193, %v192
    %v206 = vpack.c.b16 %v195, %v194
    %v207 = vpack.c.b16 %v197, %v196
    %v208 = vpack.c.b16 %v199, %v198
    %v209 = vpack.c.b16 %v201, %v200
    %218 = vmatpush.bf16.msra.mxu0 %v209
    %219 = vmatpush.bf16.msra.mxu0 %v208
    %220 = vmatpush.bf16.msra.mxu0 %v207
    %221 = vmatpush.bf16.msra.mxu0 %v206
    %222 = vmatpush.bf16.msra.mxu0 %v205
    %223 = vmatpush.bf16.msra.mxu0 %v204
    %224 = vmatpush.bf16.msra.mxu0 %v203
    %225 = vmatpush.bf16.msra.mxu0 %v202
    %226 = vmatmul.bf16.gmra.mxu0 %v147
    %v227 = vpop.f32.mrf.mxu0
    %v228 = vadd.f32 %v168, %v227
    %v229 = vpop.f32.mrf.mxu0
    %230 = vdwg.mxu0
    %v231 = vtanh.pop %v228
    %v232 = vpack.c.bf16 %v231, %v231
    %s233 = scalar_lea.vmem [#allocation5], 128
    %v234 = vld [vmem:[%s233] sm:$0xf]
    %v235 = vld [vmem:[%s233 + $0x4] sm:$0xf]
    %v236 = vld [vmem:[%s233 + $0x8] sm:$0xf]
    %v237 = vld [vmem:[%s233 + $0xc] sm:$0xf]
    %v238 = vld [vmem:[%s233 + $0x10] sm:$0xf]
    %v239 = vld [vmem:[%s233 + $0x14] sm:$0xf]
    %v240 = vld [vmem:[%s233 + $0x18] sm:$0xf]
    %v241 = vld [vmem:[%s233 + $0x1c] sm:$0xf]
    %v242 = vld [vmem:[%s233 + $0x20] sm:$0xf]
    %v243 = vld [vmem:[%s233 + $0x24] sm:$0xf]
    %v244 = vld [vmem:[%s233 + $0x28] sm:$0xf]
    %v245 = vld [vmem:[%s233 + $0x2c] sm:$0xf]
    %v246 = vld [vmem:[%s233 + $0x30] sm:$0xf]
    %v247 = vld [vmem:[%s233 + $0x34] sm:$0xf]
    %v248 = vld [vmem:[%s233 + $0x38] sm:$0xf]
    %v249 = vld [vmem:[%s233 + $0x3c] sm:$0xf]
    %s250 = scalar_lea.vmem [#allocation7], 2
    %v251 = vld [vmem:[%s250] sm:$0x1]
    %v253 = vperm.slane %v251, 0
    %v271 = vunpack.c.l.b16 %v234
    %v272 = vunpack.c.l.b16 %v235
    %v273 = vunpack.c.l.b16 %v236
    %v274 = vunpack.c.l.b16 %v237
    %v275 = vunpack.c.l.b16 %v238
    %v276 = vunpack.c.l.b16 %v239
    %v277 = vunpack.c.l.b16 %v240
    %v278 = vunpack.c.l.b16 %v241
    %v279 = vunpack.c.l.b16 %v242
    %v280 = vunpack.c.l.b16 %v243
    %v281 = vunpack.c.l.b16 %v244
    %v282 = vunpack.c.l.b16 %v245
    %v283 = vunpack.c.l.b16 %v246
    %v284 = vunpack.c.l.b16 %v247
    %v285 = vunpack.c.l.b16 %v248
    %v286 = vunpack.c.l.b16 %v249
    %v287 = vpack.c.b16 %v272, %v271
    %v288 = vpack.c.b16 %v274, %v273
    %v289 = vpack.c.b16 %v276, %v275
    %v290 = vpack.c.b16 %v278, %v277
    %v291 = vpack.c.b16 %v280, %v279
    %v292 = vpack.c.b16 %v282, %v281
    %v293 = vpack.c.b16 %v284, %v283
    %v294 = vpack.c.b16 %v286, %v285
    %303 = vmatpush.bf16.msra.mxu0 %v294
    %304 = vmatpush.bf16.msra.mxu0 %v293
    %305 = vmatpush.bf16.msra.mxu0 %v292
    %306 = vmatpush.bf16.msra.mxu0 %v291
    %307 = vmatpush.bf16.msra.mxu0 %v290
    %308 = vmatpush.bf16.msra.mxu0 %v289
    %309 = vmatpush.bf16.msra.mxu0 %v288
    %310 = vmatpush.bf16.msra.mxu0 %v287
    %311 = vmatmul.bf16.gmra.mxu0 %v232
    %v312 = vpop.f32.mrf.mxu0
    %v313 = vadd.f32 %v253, %v312
    %v314 = vpop.f32.mrf.mxu0
    %315 = vdwg.mxu0
    %v316 = vtanh.pop %v313
    %v317 = vpack.c.bf16 %v316, %v316
    %s318 = scalar_lea.vmem [#allocation5], 192
    %v319 = vld [vmem:[%s318] sm:$0xf]
    %v320 = vld [vmem:[%s318 + $0x4] sm:$0xf]
    %v321 = vld [vmem:[%s318 + $0x8] sm:$0xf]
    %v322 = vld [vmem:[%s318 + $0xc] sm:$0xf]
    %v323 = vld [vmem:[%s318 + $0x10] sm:$0xf]
    %v324 = vld [vmem:[%s318 + $0x14] sm:$0xf]
    %v325 = vld [vmem:[%s318 + $0x18] sm:$0xf]
    %v326 = vld [vmem:[%s318 + $0x1c] sm:$0xf]
    %v327 = vld [vmem:[%s318 + $0x20] sm:$0xf]
    %v328 = vld [vmem:[%s318 + $0x24] sm:$0xf]
    %v329 = vld [vmem:[%s318 + $0x28] sm:$0xf]
    %v330 = vld [vmem:[%s318 + $0x2c] sm:$0xf]
    %v331 = vld [vmem:[%s318 + $0x30] sm:$0xf]
    %v332 = vld [vmem:[%s318 + $0x34] sm:$0xf]
    %v333 = vld [vmem:[%s318 + $0x38] sm:$0xf]
    %v334 = vld [vmem:[%s318 + $0x3c] sm:$0xf]
    %s335 = scalar_lea.vmem [#allocation7], 3
    %v336 = vld [vmem:[%s335] sm:$0x1]
    %v338 = vperm.slane %v336, 0
    %v356 = vunpack.c.l.b16 %v319
    %v357 = vunpack.c.l.b16 %v320
    %v358 = vunpack.c.l.b16 %v321
    %v359 = vunpack.c.l.b16 %v322
    %v360 = vunpack.c.l.b16 %v323
    %v361 = vunpack.c.l.b16 %v324
    %v362 = vunpack.c.l.b16 %v325
    %v363 = vunpack.c.l.b16 %v326
    %v364 = vunpack.c.l.b16 %v327
    %v365 = vunpack.c.l.b16 %v328
    %v366 = vunpack.c.l.b16 %v329
    %v367 = vunpack.c.l.b16 %v330
    %v368 = vunpack.c.l.b16 %v331
    %v369 = vunpack.c.l.b16 %v332
    %v370 = vunpack.c.l.b16 %v333
    %v371 = vunpack.c.l.b16 %v334
    %v372 = vpack.c.b16 %v357, %v356
    %v373 = vpack.c.b16 %v359, %v358
    %v374 = vpack.c.b16 %v361, %v360
    %v375 = vpack.c.b16 %v363, %v362
    %v376 = vpack.c.b16 %v365, %v364
    %v377 = vpack.c.b16 %v367, %v366
    %v378 = vpack.c.b16 %v369, %v368
    %v379 = vpack.c.b16 %v371, %v370
    %388 = vmatpush.bf16.msra.mxu0 %v379
    %389 = vmatpush.bf16.msra.mxu0 %v378
    %390 = vmatpush.bf16.msra.mxu0 %v377
    %391 = vmatpush.bf16.msra.mxu0 %v376
    %392 = vmatpush.bf16.msra.mxu0 %v375
    %393 = vmatpush.bf16.msra.mxu0 %v374
    %394 = vmatpush.bf16.msra.mxu0 %v373
    %395 = vmatpush.bf16.msra.mxu0 %v372
    %396 = vmatmul.bf16.gmra.mxu0 %v317
    %v397 = vpop.f32.mrf.mxu0
    %v398 = vadd.f32 %v338, %v397
    %v399 = vpop.f32.mrf.mxu0
    %400 = vdwg.mxu0
    %v401 = vtanh.pop %v398
    %v402 = vpack.c.bf16 %v401, %v401
    %s403 = scalar_lea.vmem [#allocation5], 256
    %v404 = vld [vmem:[%s403] sm:$0xf]
    %v405 = vld [vmem:[%s403 + $0x4] sm:$0xf]
    %v406 = vld [vmem:[%s403 + $0x8] sm:$0xf]
    %v407 = vld [vmem:[%s403 + $0xc] sm:$0xf]
    %v408 = vld [vmem:[%s403 + $0x10] sm:$0xf]
    %v409 = vld [vmem:[%s403 + $0x14] sm:$0xf]
    %v410 = vld [vmem:[%s403 + $0x18] sm:$0xf]
    %v411 = vld [vmem:[%s403 + $0x1c] sm:$0xf]
    %v412 = vld [vmem:[%s403 + $0x20] sm:$0xf]
    %v413 = vld [vmem:[%s403 + $0x24] sm:$0xf]
    %v414 = vld [vmem:[%s403 + $0x28] sm:$0xf]
    %v415 = vld [vmem:[%s403 + $0x2c] sm:$0xf]
    %v416 = vld [vmem:[%s403 + $0x30] sm:$0xf]
    %v417 = vld [vmem:[%s403 + $0x34] sm:$0xf]
    %v418 = vld [vmem:[%s403 + $0x38] sm:$0xf]
    %v419 = vld [vmem:[%s403 + $0x3c] sm:$0xf]
    %s420 = scalar_lea.vmem [#allocation7], 4
    %v421 = vld [vmem:[%s420] sm:$0x1]
    %v423 = vperm.slane %v421, 0
    %v441 = vunpack.c.l.b16 %v404
    %v442 = vunpack.c.l.b16 %v405
    %v443 = vunpack.c.l.b16 %v406
    %v444 = vunpack.c.l.b16 %v407
    %v445 = vunpack.c.l.b16 %v408
    %v446 = vunpack.c.l.b16 %v409
    %v447 = vunpack.c.l.b16 %v410
    %v448 = vunpack.c.l.b16 %v411
    %v449 = vunpack.c.l.b16 %v412
    %v450 = vunpack.c.l.b16 %v413
    %v451 = vunpack.c.l.b16 %v414
    %v452 = vunpack.c.l.b16 %v415
    %v453 = vunpack.c.l.b16 %v416
    %v454 = vunpack.c.l.b16 %v417
    %v455 = vunpack.c.l.b16 %v418
    %v456 = vunpack.c.l.b16 %v419
    %v457 = vpack.c.b16 %v442, %v441
    %v458 = vpack.c.b16 %v444, %v443
    %v459 = vpack.c.b16 %v446, %v445
    %v460 = vpack.c.b16 %v448, %v447
    %v461 = vpack.c.b16 %v450, %v449
    %v462 = vpack.c.b16 %v452, %v451
    %v463 = vpack.c.b16 %v454, %v453
    %v464 = vpack.c.b16 %v456, %v455
    %473 = vmatpush.bf16.msra.mxu0 %v464
    %474 = vmatpush.bf16.msra.mxu0 %v463
    %475 = vmatpush.bf16.msra.mxu0 %v462
    %476 = vmatpush.bf16.msra.mxu0 %v461
    %477 = vmatpush.bf16.msra.mxu0 %v460
    %478 = vmatpush.bf16.msra.mxu0 %v459
    %479 = vmatpush.bf16.msra.mxu0 %v458
    %480 = vmatpush.bf16.msra.mxu0 %v457
    %481 = vmatmul.bf16.gmra.mxu0 %v402
    %v482 = vpop.f32.mrf.mxu0
    %v483 = vadd.f32 %v423, %v482
    %v484 = vpop.f32.mrf.mxu0
    %485 = vdwg.mxu0
    %v486 = vtanh.pop %v483
    %v487 = vpack.c.bf16 %v486, %v486
    %s488 = scalar_lea.vmem [#allocation5], 320
    %v489 = vld [vmem:[%s488] sm:$0xf]
    %v490 = vld [vmem:[%s488 + $0x4] sm:$0xf]
    %v491 = vld [vmem:[%s488 + $0x8] sm:$0xf]
    %v492 = vld [vmem:[%s488 + $0xc] sm:$0xf]
    %v493 = vld [vmem:[%s488 + $0x10] sm:$0xf]
    %v494 = vld [vmem:[%s488 + $0x14] sm:$0xf]
    %v495 = vld [vmem:[%s488 + $0x18] sm:$0xf]
    %v496 = vld [vmem:[%s488 + $0x1c] sm:$0xf]
    %v497 = vld [vmem:[%s488 + $0x20] sm:$0xf]
    %v498 = vld [vmem:[%s488 + $0x24] sm:$0xf]
    %v499 = vld [vmem:[%s488 + $0x28] sm:$0xf]
    %v500 = vld [vmem:[%s488 + $0x2c] sm:$0xf]
    %v501 = vld [vmem:[%s488 + $0x30] sm:$0xf]
    %v502 = vld [vmem:[%s488 + $0x34] sm:$0xf]
    %v503 = vld [vmem:[%s488 + $0x38] sm:$0xf]
    %v504 = vld [vmem:[%s488 + $0x3c] sm:$0xf]
    %s505 = scalar_lea.vmem [#allocation7], 5
    %v506 = vld [vmem:[%s505] sm:$0x1]
    %v508 = vperm.slane %v506, 0
    %v526 = vunpack.c.l.b16 %v489
    %v527 = vunpack.c.l.b16 %v490
    %v528 = vunpack.c.l.b16 %v491
    %v529 = vunpack.c.l.b16 %v492
    %v530 = vunpack.c.l.b16 %v493
    %v531 = vunpack.c.l.b16 %v494
    %v532 = vunpack.c.l.b16 %v495
    %v533 = vunpack.c.l.b16 %v496
    %v534 = vunpack.c.l.b16 %v497
    %v535 = vunpack.c.l.b16 %v498
    %v536 = vunpack.c.l.b16 %v499
    %v537 = vunpack.c.l.b16 %v500
    %v538 = vunpack.c.l.b16 %v501
    %v539 = vunpack.c.l.b16 %v502
    %v540 = vunpack.c.l.b16 %v503
    %v541 = vunpack.c.l.b16 %v504
    %v542 = vpack.c.b16 %v527, %v526
    %v543 = vpack.c.b16 %v529, %v528
    %v544 = vpack.c.b16 %v531, %v530
    %v545 = vpack.c.b16 %v533, %v532
    %v546 = vpack.c.b16 %v535, %v534
    %v547 = vpack.c.b16 %v537, %v536
    %v548 = vpack.c.b16 %v539, %v538
    %v549 = vpack.c.b16 %v541, %v540
    %558 = vmatpush.bf16.msra.mxu0 %v549
    %559 = vmatpush.bf16.msra.mxu0 %v548
    %560 = vmatpush.bf16.msra.mxu0 %v547
    %561 = vmatpush.bf16.msra.mxu0 %v546
    %562 = vmatpush.bf16.msra.mxu0 %v545
    %563 = vmatpush.bf16.msra.mxu0 %v544
    %564 = vmatpush.bf16.msra.mxu0 %v543
    %565 = vmatpush.bf16.msra.mxu0 %v542
    %566 = vmatmul.bf16.gmra.mxu0 %v487
    %v567 = vpop.f32.mrf.mxu0
    %v568 = vadd.f32 %v508, %v567
    %v569 = vpop.f32.mrf.mxu0
    %570 = vdwg.mxu0
    %v571 = vtanh.pop %v568
    %vm572 = vcmask 15360
    %573 = vst.msk [vmem:[%s3] sm:$0xff] %vm572, %v571
    // Predicated region
    $region26: #{tpu_custom_call.1} parent=1 // pred_check
      _
    $region27: #{tpu_custom_call.1} parent=1 // pred_check_branch
      %575 = sbr.rel (0) target = $region29
    $region28: #{tpu_custom_call.1} parent=1 // pred_region
      _
    $region29: #{tpu_custom_call.1} parent=1 // pred_fallthru
      _
    // Predicated region
    $region30: #{tpu_custom_call.1} parent=1 // pred_check
      _
    $region31: #{tpu_custom_call.1} parent=1 // pred_check_branch
      %577 = sbr.rel (0) target = $region33
    $region32: #{tpu_custom_call.1} parent=1 // pred_region
      _
    $region33: #{tpu_custom_call.1} parent=1 // pred_fallthru
      _
    %578 = vsyncpa [#allocation4], 1
    %579 = vsyncpa [#allocation6], 1

</llo_original>
